<compile_context>
chip_gen: v7x
topology: tpu7x:2x2x1
jax: 0.10.0
libtpu: 0.0.40
codegen_flags: <defaults>
</compile_context>

<pallas_src>
import jax
import jax.numpy as jnp
import numpy as np
from jax.experimental import pallas as pl
from jax.experimental.pallas import tpu as pltpu

SCALES = (2, 3, 5, 6)      # pool kernel == stride for the four branches
LEAKY_SLOPE = 0.01         # nn.LeakyReLU() default


# ----------------------------------------------------------------------------
# Precomputed constant matrices (built once in the wrapper).
# ----------------------------------------------------------------------------
def _row_select_matrix(H, k):
    """(H, H) one-hot: output row h picks source row floor(h*Hp/H)*k, i.e. the
    row of the H-axis running-window-max slab that holds the pooled value."""
    Hp = H // k
    src = ((np.arange(H) * Hp) // H) * k
    m = np.zeros((H, H), np.float32)
    m[np.arange(H), src] = 1.0
    return m


def _col_select_matrix(W, k):
    """(W, W) one-hot: sel[g, w] = 1 iff source column group g == floor(w*Wp/W)*k,
    i.e. the column group of the W-axis running-window-max slab holding the
    pooled value for output width w."""
    Wp = W // k
    src = ((np.arange(W) * Wp) // W) * k
    m = np.zeros((W, W), np.float32)
    m[src, np.arange(W)] = 1.0
    return m


def _pick_block_batch(N, H):
    """Largest batch-block Nb that (a) divides N, (b) leaves >= 2 grid steps when
    N >= 2 (keeps both v7x TensorCores busy), and (c) keeps the block-diagonal
    row-upsample matrices small (Nb*H <= 128 rows)."""
    best = 1
    for nb in range(1, N + 1):
        if N % nb:
            continue
        if N >= 2 and N // nb < 2:
            continue
        if nb * H > 128:
            continue
        best = nb
    return best


# ----------------------------------------------------------------------------
# Kernel
# ----------------------------------------------------------------------------
def _make_kernel(Nb, H, W, C, Cout):
    R = Nb * H          # rows of the packed slab (Nb batch elements stacked)
    L = W * C           # lane-dense width

    def kernel(x_ref, r_ref, m_ref, b_ref, out_ref):
        # x_ref: (Nb, H, W*C)  ->  lane-dense slab (Nb*H, W*C)
        x = x_ref[...].astype(jnp.float32).reshape(R, L)

        # --- H-axis pooling, shared across branches.  After this, row r of
        # win_max[k] holds max(x[r : r+k]); rows that would wrap across the
        # batch/slab boundary are never selected (row-upsample matrix is zero
        # there).  Row shifts lower to sublane slice+concat; max runs on VPU.
        win_max = {1: x}
        cur = x
        for j in range(1, max(SCALES)):
            cur = jnp.maximum(cur, jnp.roll(x, -j, axis=0))
            win_max[j + 1] = cur

        # --- Per branch: W-axis pooling via channel-group column shifts (stay
        # lane-dense, no down-select), then nearest row-upsample via a tiny
        # block-diagonal one-hot matmul.
        urs = []
        for i, k in enumerate(SCALES):
            t = win_max[k]
            cmax = t
            for j in range(1, k):
                cmax = jnp.maximum(cmax, jnp.roll(t, -j * C, axis=1))
            urs.append(jnp.dot(r_ref[i], cmax,
                               preferred_element_type=jnp.float32))   # (R, L)

        # --- All four branches fused into ONE matmul: K = 4*W*C, N = W*Cout.
        # m_ref folds (W-pool column selection) x (nearest W-upsample) x
        # (branch-weighted 1x1 conv); the branch sum happens inside the MXU.
        ur_cat = jnp.concatenate(urs, axis=1)                          # (R, 4*L)
        acc = x + b_ref[...] + jnp.dot(ur_cat, m_ref[...],
                                       preferred_element_type=jnp.float32)

        z = jnp.where(acc >= 0, acc, LEAKY_SLOPE * acc)                # LeakyReLU(0.01)
        out_ref[...] = z.reshape(Nb, H, W * Cout).astype(out_ref.dtype)

    return kernel


# ----------------------------------------------------------------------------
# Wrapper
# ----------------------------------------------------------------------------
def mkpm_forward(x_nchw, conv_w, conv_b, branch_w):
    """x_nchw: (N, C, H, W).  conv_w: 4 x (C, Cout).  conv_b: 4 x (1, Cout).
    branch_w: (4,)."""
    N, C, H, W = x_nchw.shape
    Cout = conv_w[0].shape[1]
    assert Cout == C, "residual add requires out_channels == in_channels"
    assert H >= max(SCALES) and W >= max(SCALES), "spatial dims must cover pool windows"

    L = W * C
    Nb = _pick_block_batch(N, H)
    R = Nb * H

    # Layout glue: NCHW -> lane-dense (N, H, W*C).  These two transposes are
    # extra HBM round trips; they vanish if the surrounding model is NHWC.
    x_flat = jnp.transpose(x_nchw, (0, 2, 3, 1)).reshape(N, H, L)

    # Row-upsample one-hot matrices (per branch), block-diagonal over the Nb
    # batch elements packed into one slab.  Pure 0/1 -> numpy.
    r_np = np.stack([np.kron(np.eye(Nb, dtype=np.float32), _row_select_matrix(H, k))
                     for k in SCALES])                                  # (4, R, R)
    r_stack = jnp.asarray(r_np)

    # Fused (W-pool column selection) x (nearest W-upsample) x (branch-weighted
    # 1x1 conv) matrices, stacked along the contraction dim -> (4*W*C, W*Cout).
    m_blocks = []
    for i, k in enumerate(SCALES):
        sel = jnp.asarray(_col_select_matrix(W, k))                     # (W, W)
        wgt = branch_w[i] * conv_w[i]                                   # (C, Cout)
        m_blocks.append(jnp.einsum("gw,cd->gcwd", sel, wgt).reshape(L, W * Cout))
    m_big = jnp.concatenate(m_blocks, axis=0)                           # (4*L, W*Cout)

    # Biases commute with nearest upsample -> single hoisted add.
    b_total = sum(branch_w[i] * conv_b[i].reshape(Cout) for i in range(4))
    b_row = jnp.tile(b_total, W).reshape(1, W * Cout)

    out = pl.pallas_call(
        _make_kernel(Nb, H, W, C, Cout),
        out_shape=jax.ShapeDtypeStruct((N, H, W * Cout), x_nchw.dtype),
        grid=(N // Nb,),
        in_specs=[
            pl.BlockSpec((Nb, H, L), lambda n: (n, 0, 0)),
            pl.BlockSpec((4, R, R), lambda n: (0, 0, 0)),        # resident constants
            pl.BlockSpec((4 * L, W * Cout), lambda n: (0, 0)),   # resident constants
            pl.BlockSpec((1, W * Cout), lambda n: (0, 0)),       # resident constants
        ],
        out_specs=pl.BlockSpec((Nb, H, W * Cout), lambda n: (n, 0, 0)),
        compiler_params=pltpu.CompilerParams(dimension_semantics=("parallel",)),
    )(x_flat, r_stack, m_big, b_row)

    out = out.reshape(N, H, W, Cout)
    return jnp.transpose(out, (0, 3, 1, 2))                             # NHWC -> NCHW


# ----------------------------------------------------------------------------
# Pure-JAX reference (mirrors the PyTorch forward, NCHW)
# ----------------------------------------------------------------------------
def mkpm_reference(x_nchw, conv_w, conv_b, branch_w):
    N, C, H, W = x_nchw.shape
    acc = jnp.zeros((N, conv_w[0].shape[1], H, W), jnp.float32)
    for idx, k in enumerate(SCALES):
        Hp, Wp = H // k, W // k
        t = x_nchw[:, :, : Hp * k, : Wp * k].reshape(N, C, Hp, k, Wp, k)
        p = t.max(axis=(3, 5))
        y = jnp.einsum("nchw,cd->ndhw", p, conv_w[idx]) + conv_b[idx].reshape(1, -1, 1, 1)
        ih = (jnp.arange(H) * Hp) // H
        iw = (jnp.arange(W) * Wp) // W
        up = y[:, :, ih][:, :, :, iw]
        acc = acc + branch_w[idx] * up
    z = acc + x_nchw
    return jnp.where(z >= 0, z, LEAKY_SLOPE * z)


if __name__ == "__main__":
    N, C, H, W = 2, 8, 16, 16          # in_channels == out_channels (residual add), W*C = 128
    Cout = C

    key = jax.random.PRNGKey(0)
    kx, *kp = jax.random.split(key, 9)
    x = jax.random.normal(kx, (N, C, H, W), dtype=jnp.float32)
    conv_w = [0.1 * jax.random.normal(kp[2 * i], (C, Cout), dtype=jnp.float32) for i in range(4)]
    conv_b = [0.1 * jax.random.normal(kp[2 * i + 1], (1, Cout), dtype=jnp.float32) for i in range(4)]
    branch_w = jnp.array([1.0, 1.0, 1.0, 1.0], dtype=jnp.float32)   # nn.Parameter([1.]*4)

    out = jax.block_until_ready(mkpm_forward(x, conv_w, conv_b, branch_w))
    ref = jax.block_until_ready(mkpm_reference(x, conv_w, conv_b, branch_w))

    assert out.shape == (N, Cout, H, W)
    assert jnp.allclose(out, ref, rtol=1e-4, atol=1e-4), "mismatch vs pure-JAX reference"
    print("KERNEL_OK")
</pallas_src>

<mosaic_0001>
module attributes {stable_mosaic.version = 11 : i64} {
  func.func @kernel(%arg0: i32, %arg1: memref<1x16x128xf32, #tpu.memory_space<vmem>>, %arg2: memref<4x16x16xf32, #tpu.memory_space<vmem>>, %arg3: memref<512x128xf32, #tpu.memory_space<vmem>>, %arg4: memref<1x128xf32, #tpu.memory_space<vmem>>, %arg5: memref<1x16x128xf32, #tpu.memory_space<vmem>>) attributes {dimension_semantics = [#tpu.dimension_semantics<parallel>], iteration_bounds = array<i64: 2>, scalar_prefetch = 0 : i64, scratch_operands = 0 : i64, tpu.core_type = #tpu.core_type<tc>, window_params = [{transform_indices = @transform_0, window_bounds = array<i64: 1, 16, 128>}, {pipeline_mode = #tpu.pipeline_mode<synchronous>, transform_indices = @transform_1, window_bounds = array<i64: 4, 16, 16>}, {pipeline_mode = #tpu.pipeline_mode<synchronous>, transform_indices = @transform_2, window_bounds = array<i64: 512, 128>}, {pipeline_mode = #tpu.pipeline_mode<synchronous>, transform_indices = @transform_3, window_bounds = array<i64: 1, 128>}, {transform_indices = @transform_4, window_bounds = array<i64: 1, 16, 128>}]} {
    %c0 = arith.constant 0 : index
    %c0_0 = arith.constant 0 : index
    %c0_1 = arith.constant 0 : index
    %0 = vector.load %arg1[%c0, %c0_0, %c0_1] : memref<1x16x128xf32, #tpu.memory_space<vmem>>, vector<1x16x128xf32>
    %1 = vector.shape_cast %0 : vector<1x16x128xf32> to vector<16x128xf32>
    %2 = vector.extract_strided_slice %1 {offsets = [1, 0], sizes = [15, 128], strides = [1, 1]} : vector<16x128xf32> to vector<15x128xf32>
    %3 = vector.extract_strided_slice %1 {offsets = [0, 0], sizes = [1, 128], strides = [1, 1]} : vector<16x128xf32> to vector<1x128xf32>
    %4 = tpu.concatenate %2, %3 in 0 : vector<15x128xf32>, vector<1x128xf32> -> vector<16x128xf32>
    %5 = arith.maximumf %1, %4 : vector<16x128xf32>
    %6 = vector.extract_strided_slice %1 {offsets = [2, 0], sizes = [14, 128], strides = [1, 1]} : vector<16x128xf32> to vector<14x128xf32>
    %7 = vector.extract_strided_slice %1 {offsets = [0, 0], sizes = [2, 128], strides = [1, 1]} : vector<16x128xf32> to vector<2x128xf32>
    %8 = tpu.concatenate %6, %7 in 0 : vector<14x128xf32>, vector<2x128xf32> -> vector<16x128xf32>
    %9 = arith.maximumf %5, %8 : vector<16x128xf32>
    %10 = vector.extract_strided_slice %1 {offsets = [3, 0], sizes = [13, 128], strides = [1, 1]} : vector<16x128xf32> to vector<13x128xf32>
    %11 = vector.extract_strided_slice %1 {offsets = [0, 0], sizes = [3, 128], strides = [1, 1]} : vector<16x128xf32> to vector<3x128xf32>
    %12 = tpu.concatenate %10, %11 in 0 : vector<13x128xf32>, vector<3x128xf32> -> vector<16x128xf32>
    %13 = arith.maximumf %9, %12 : vector<16x128xf32>
    %14 = vector.extract_strided_slice %1 {offsets = [4, 0], sizes = [12, 128], strides = [1, 1]} : vector<16x128xf32> to vector<12x128xf32>
    %15 = vector.extract_strided_slice %1 {offsets = [0, 0], sizes = [4, 128], strides = [1, 1]} : vector<16x128xf32> to vector<4x128xf32>
    %16 = tpu.concatenate %14, %15 in 0 : vector<12x128xf32>, vector<4x128xf32> -> vector<16x128xf32>
    %17 = arith.maximumf %13, %16 : vector<16x128xf32>
    %18 = vector.extract_strided_slice %1 {offsets = [5, 0], sizes = [11, 128], strides = [1, 1]} : vector<16x128xf32> to vector<11x128xf32>
    %19 = vector.extract_strided_slice %1 {offsets = [0, 0], sizes = [5, 128], strides = [1, 1]} : vector<16x128xf32> to vector<5x128xf32>
    %20 = tpu.concatenate %18, %19 in 0 : vector<11x128xf32>, vector<5x128xf32> -> vector<16x128xf32>
    %21 = arith.maximumf %17, %20 : vector<16x128xf32>
    %22 = vector.extract_strided_slice %5 {offsets = [0, 8], sizes = [16, 120], strides = [1, 1]} : vector<16x128xf32> to vector<16x120xf32>
    %23 = vector.extract_strided_slice %5 {offsets = [0, 0], sizes = [16, 8], strides = [1, 1]} : vector<16x128xf32> to vector<16x8xf32>
    %24 = tpu.concatenate %22, %23 in 1 : vector<16x120xf32>, vector<16x8xf32> -> vector<16x128xf32>
    %25 = arith.maximumf %5, %24 : vector<16x128xf32>
    %c0_2 = arith.constant 0 : index
    %c0_3 = arith.constant 0 : index
    %c0_4 = arith.constant 0 : index
    %26 = vector.load %arg2[%c0_2, %c0_3, %c0_4] : memref<4x16x16xf32, #tpu.memory_space<vmem>>, vector<1x16x16xf32>
    %27 = vector.shape_cast %26 : vector<1x16x16xf32> to vector<16x16xf32>
    %cst = arith.constant dense<0.000000e+00> : vector<16x128xf32>
    %28 = tpu.matmul %27, %25, %cst {dimension_numbers = #tpu.dot_dimension_numbers<[1], [0], [0], [1], [0, 0, 1, 1], [], []>} : vector<16x16xf32>, vector<16x128xf32>, vector<16x128xf32> -> vector<16x128xf32>
    %29 = vector.extract_strided_slice %9 {offsets = [0, 8], sizes = [16, 120], strides = [1, 1]} : vector<16x128xf32> to vector<16x120xf32>
    %30 = vector.extract_strided_slice %9 {offsets = [0, 0], sizes = [16, 8], strides = [1, 1]} : vector<16x128xf32> to vector<16x8xf32>
    %31 = tpu.concatenate %29, %30 in 1 : vector<16x120xf32>, vector<16x8xf32> -> vector<16x128xf32>
    %32 = arith.maximumf %9, %31 : vector<16x128xf32>
    %33 = vector.extract_strided_slice %9 {offsets = [0, 16], sizes = [16, 112], strides = [1, 1]} : vector<16x128xf32> to vector<16x112xf32>
    %34 = vector.extract_strided_slice %9 {offsets = [0, 0], sizes = [16, 16], strides = [1, 1]} : vector<16x128xf32> to vector<16x16xf32>
    %35 = tpu.concatenate %33, %34 in 1 : vector<16x112xf32>, vector<16x16xf32> -> vector<16x128xf32>
    %36 = arith.maximumf %32, %35 : vector<16x128xf32>
    %c1 = arith.constant 1 : index
    %c0_5 = arith.constant 0 : index
    %c0_6 = arith.constant 0 : index
    %37 = vector.load %arg2[%c1, %c0_5, %c0_6] : memref<4x16x16xf32, #tpu.memory_space<vmem>>, vector<1x16x16xf32>
    %38 = vector.shape_cast %37 : vector<1x16x16xf32> to vector<16x16xf32>
    %cst_7 = arith.constant dense<0.000000e+00> : vector<16x128xf32>
    %39 = tpu.matmul %38, %36, %cst_7 {dimension_numbers = #tpu.dot_dimension_numbers<[1], [0], [0], [1], [0, 0, 1, 1], [], []>} : vector<16x16xf32>, vector<16x128xf32>, vector<16x128xf32> -> vector<16x128xf32>
    %40 = vector.extract_strided_slice %17 {offsets = [0, 8], sizes = [16, 120], strides = [1, 1]} : vector<16x128xf32> to vector<16x120xf32>
    %41 = vector.extract_strided_slice %17 {offsets = [0, 0], sizes = [16, 8], strides = [1, 1]} : vector<16x128xf32> to vector<16x8xf32>
    %42 = tpu.concatenate %40, %41 in 1 : vector<16x120xf32>, vector<16x8xf32> -> vector<16x128xf32>
    %43 = arith.maximumf %17, %42 : vector<16x128xf32>
    %44 = vector.extract_strided_slice %17 {offsets = [0, 16], sizes = [16, 112], strides = [1, 1]} : vector<16x128xf32> to vector<16x112xf32>
    %45 = vector.extract_strided_slice %17 {offsets = [0, 0], sizes = [16, 16], strides = [1, 1]} : vector<16x128xf32> to vector<16x16xf32>
    %46 = tpu.concatenate %44, %45 in 1 : vector<16x112xf32>, vector<16x16xf32> -> vector<16x128xf32>
    %47 = arith.maximumf %43, %46 : vector<16x128xf32>
    %48 = vector.extract_strided_slice %17 {offsets = [0, 24], sizes = [16, 104], strides = [1, 1]} : vector<16x128xf32> to vector<16x104xf32>
    %49 = vector.extract_strided_slice %17 {offsets = [0, 0], sizes = [16, 24], strides = [1, 1]} : vector<16x128xf32> to vector<16x24xf32>
    %50 = tpu.concatenate %48, %49 in 1 : vector<16x104xf32>, vector<16x24xf32> -> vector<16x128xf32>
    %51 = arith.maximumf %47, %50 : vector<16x128xf32>
    %52 = vector.extract_strided_slice %17 {offsets = [0, 32], sizes = [16, 96], strides = [1, 1]} : vector<16x128xf32> to vector<16x96xf32>
    %53 = vector.extract_strided_slice %17 {offsets = [0, 0], sizes = [16, 32], strides = [1, 1]} : vector<16x128xf32> to vector<16x32xf32>
    %54 = tpu.concatenate %52, %53 in 1 : vector<16x96xf32>, vector<16x32xf32> -> vector<16x128xf32>
    %55 = arith.maximumf %51, %54 : vector<16x128xf32>
    %c2 = arith.constant 2 : index
    %c0_8 = arith.constant 0 : index
    %c0_9 = arith.constant 0 : index
    %56 = vector.load %arg2[%c2, %c0_8, %c0_9] : memref<4x16x16xf32, #tpu.memory_space<vmem>>, vector<1x16x16xf32>
    %57 = vector.shape_cast %56 : vector<1x16x16xf32> to vector<16x16xf32>
    %cst_10 = arith.constant dense<0.000000e+00> : vector<16x128xf32>
    %58 = tpu.matmul %57, %55, %cst_10 {dimension_numbers = #tpu.dot_dimension_numbers<[1], [0], [0], [1], [0, 0, 1, 1], [], []>} : vector<16x16xf32>, vector<16x128xf32>, vector<16x128xf32> -> vector<16x128xf32>
    %59 = vector.extract_strided_slice %21 {offsets = [0, 8], sizes = [16, 120], strides = [1, 1]} : vector<16x128xf32> to vector<16x120xf32>
    %60 = vector.extract_strided_slice %21 {offsets = [0, 0], sizes = [16, 8], strides = [1, 1]} : vector<16x128xf32> to vector<16x8xf32>
    %61 = tpu.concatenate %59, %60 in 1 : vector<16x120xf32>, vector<16x8xf32> -> vector<16x128xf32>
    %62 = arith.maximumf %21, %61 : vector<16x128xf32>
    %63 = vector.extract_strided_slice %21 {offsets = [0, 16], sizes = [16, 112], strides = [1, 1]} : vector<16x128xf32> to vector<16x112xf32>
    %64 = vector.extract_strided_slice %21 {offsets = [0, 0], sizes = [16, 16], strides = [1, 1]} : vector<16x128xf32> to vector<16x16xf32>
    %65 = tpu.concatenate %63, %64 in 1 : vector<16x112xf32>, vector<16x16xf32> -> vector<16x128xf32>
    %66 = arith.maximumf %62, %65 : vector<16x128xf32>
    %67 = vector.extract_strided_slice %21 {offsets = [0, 24], sizes = [16, 104], strides = [1, 1]} : vector<16x128xf32> to vector<16x104xf32>
    %68 = vector.extract_strided_slice %21 {offsets = [0, 0], sizes = [16, 24], strides = [1, 1]} : vector<16x128xf32> to vector<16x24xf32>
    %69 = tpu.concatenate %67, %68 in 1 : vector<16x104xf32>, vector<16x24xf32> -> vector<16x128xf32>
    %70 = arith.maximumf %66, %69 : vector<16x128xf32>
    %71 = vector.extract_strided_slice %21 {offsets = [0, 32], sizes = [16, 96], strides = [1, 1]} : vector<16x128xf32> to vector<16x96xf32>
    %72 = vector.extract_strided_slice %21 {offsets = [0, 0], sizes = [16, 32], strides = [1, 1]} : vector<16x128xf32> to vector<16x32xf32>
    %73 = tpu.concatenate %71, %72 in 1 : vector<16x96xf32>, vector<16x32xf32> -> vector<16x128xf32>
    %74 = arith.maximumf %70, %73 : vector<16x128xf32>
    %75 = vector.extract_strided_slice %21 {offsets = [0, 40], sizes = [16, 88], strides = [1, 1]} : vector<16x128xf32> to vector<16x88xf32>
    %76 = vector.extract_strided_slice %21 {offsets = [0, 0], sizes = [16, 40], strides = [1, 1]} : vector<16x128xf32> to vector<16x40xf32>
    %77 = tpu.concatenate %75, %76 in 1 : vector<16x88xf32>, vector<16x40xf32> -> vector<16x128xf32>
    %78 = arith.maximumf %74, %77 : vector<16x128xf32>
    %c3 = arith.constant 3 : index
    %c0_11 = arith.constant 0 : index
    %c0_12 = arith.constant 0 : index
    %79 = vector.load %arg2[%c3, %c0_11, %c0_12] : memref<4x16x16xf32, #tpu.memory_space<vmem>>, vector<1x16x16xf32>
    %80 = vector.shape_cast %79 : vector<1x16x16xf32> to vector<16x16xf32>
    %cst_13 = arith.constant dense<0.000000e+00> : vector<16x128xf32>
    %81 = tpu.matmul %80, %78, %cst_13 {dimension_numbers = #tpu.dot_dimension_numbers<[1], [0], [0], [1], [0, 0, 1, 1], [], []>} : vector<16x16xf32>, vector<16x128xf32>, vector<16x128xf32> -> vector<16x128xf32>
    %82 = tpu.concatenate %28, %39, %58, %81 in 1 : vector<16x128xf32>, vector<16x128xf32>, vector<16x128xf32>, vector<16x128xf32> -> vector<16x512xf32>
    %c0_14 = arith.constant 0 : index
    %c0_15 = arith.constant 0 : index
    %83 = vector.load %arg4[%c0_14, %c0_15] : memref<1x128xf32, #tpu.memory_space<vmem>>, vector<1x128xf32>
    %84 = vector.broadcast %83 : vector<1x128xf32> to vector<16x128xf32>
    %85 = arith.addf %1, %84 : vector<16x128xf32>
    %c0_16 = arith.constant 0 : index
    %c0_17 = arith.constant 0 : index
    %86 = vector.load %arg3[%c0_16, %c0_17] : memref<512x128xf32, #tpu.memory_space<vmem>>, vector<512x128xf32>
    %cst_18 = arith.constant dense<0.000000e+00> : vector<16x128xf32>
    %87 = tpu.matmul %82, %86, %cst_18 {dimension_numbers = #tpu.dot_dimension_numbers<[1], [0], [0], [1], [0, 0, 1, 1], [], []>} : vector<16x512xf32>, vector<512x128xf32>, vector<16x128xf32> -> vector<16x128xf32>
    %88 = arith.addf %85, %87 : vector<16x128xf32>
    %cst_19 = arith.constant 0.000000e+00 : f32
    %89 = vector.broadcast %cst_19 : f32 to vector<16x128xf32>
    %90 = arith.cmpf oge, %88, %89 : vector<16x128xf32>
    %cst_20 = arith.constant 0.00999999977 : f32
    %91 = vector.broadcast %cst_20 : f32 to vector<16x128xf32>
    %92 = arith.mulf %91, %88 : vector<16x128xf32>
    %93 = arith.select %90, %88, %92 : vector<16x128xi1>, vector<16x128xf32>
    %94 = vector.shape_cast %93 : vector<16x128xf32> to vector<1x16x128xf32>
    %c0_21 = arith.constant 0 : index
    %c0_22 = arith.constant 0 : index
    %c0_23 = arith.constant 0 : index
    %95 = vector.load %arg5[%c0_21, %c0_22, %c0_23] : memref<1x16x128xf32, #tpu.memory_space<vmem>>, vector<1x16x128xf32>
    tpu.vector_store %arg5[%c0_21, %c0_22, %c0_23], %94 {strides = array<i32>} : memref<1x16x128xf32, #tpu.memory_space<vmem>>, vector<1x16x128xf32>,
    return
  }
  func.func @transform_0(%arg0: i32) -> (i32, i32, i32) {
    %c0_i32 = arith.constant 0 : i32
    %c0_i32_0 = arith.constant 0 : i32
    %c0_i32_1 = arith.constant 0 : i32
    return %arg0, %c0_i32, %c0_i32_0 : i32, i32, i32
  }
  func.func @transform_1(%arg0: i32) -> (i32, i32, i32) {
    %c0_i32 = arith.constant 0 : i32
    %c0_i32_0 = arith.constant 0 : i32
    %c0_i32_1 = arith.constant 0 : i32
    %c0_i32_2 = arith.constant 0 : i32
    return %c0_i32, %c0_i32_0, %c0_i32_1 : i32, i32, i32
  }
  func.func @transform_2(%arg0: i32) -> (i32, i32) {
    %c0_i32 = arith.constant 0 : i32
    %c0_i32_0 = arith.constant 0 : i32
    %c0_i32_1 = arith.constant 0 : i32
    return %c0_i32, %c0_i32_0 : i32, i32
  }
  func.func @transform_3(%arg0: i32) -> (i32, i32) {
    %c0_i32 = arith.constant 0 : i32
    %c0_i32_0 = arith.constant 0 : i32
    %c0_i32_1 = arith.constant 0 : i32
    return %c0_i32, %c0_i32_0 : i32, i32
  }
  func.func @transform_4(%arg0: i32) -> (i32, i32, i32) {
    %c0_i32 = arith.constant 0 : i32
    %c0_i32_0 = arith.constant 0 : i32
    %c0_i32_1 = arith.constant 0 : i32
    return %arg0, %c0_i32, %c0_i32_0 : i32, i32, i32
  }
}

</mosaic_0001>

<llo_original>
// kernel: tpu_custom_call.1
$region0: #{tpu_custom_call.1}
  #allocation0 [shape = 'u32[]', space=smem, size = 0x4, offset = 0x4, fixed_abs, tag = 'smem constant byte address 0x4 - core index']
  #allocation1 [shape = 'u32[144,128]{1,0:T(1,128)}', space=vmem, size = 0x12000, scoped, tag = 'internal scratch']
  %s0 = inlined_call_operand.hbm [shape: f32[2,16,128], index: 0, kind: input, shape index: {}]
  %s1 = inlined_call_operand.hbm [shape: f32[4,16,16], index: 1, kind: input, shape index: {}]
  %s2 = inlined_call_operand.hbm [shape: f32[512,128], index: 2, kind: input, shape index: {}]
  %s3 = inlined_call_operand.vmem [shape: f32[1,128], index: 3, kind: input, shape index: {}]
  %s4 = inlined_call_operand.hbm [shape: f32[2,16,128], index: 4, kind: output, shape index: {}]
  %s5 = sld [smem:[#allocation0]]
  $region61: #{tpu_custom_call.1} parent=0
    _
  %s7 = ssub.s32 1, %s5
  %s8 = scalar_select 0, %s7, %s5
  $region1: #{tpu_custom_call.1} parent=0
    #allocation2 [shape = 'u8[16384]{0}', space=vmem, size = 0x4000, scoped, tag = 'input window, operand 0']
    #allocation3 [shape = 's32[2]{0}', space=sflag, size = 0x8, scoped, tag = 'scoped memory for tpu_custom_call.1']
    #allocation4 [shape = 's32[2]{0}', space=sflag, size = 0x8, scoped, tag = 'scoped memory for tpu_custom_call.1']
    #allocation5 [shape = 'u8[32768]{0}', space=vmem, size = 0x8000, scoped, tag = 'input window, operand 1, single buffered']
    #allocation6 [shape = 's32[1]{0}', space=sflag, size = 0x4, scoped, tag = 'scoped memory for tpu_custom_call.1']
    #allocation7 [shape = 'u8[262144]{0}', space=vmem, size = 0x40000, scoped, tag = 'input window, operand 2, single buffered']
    #allocation8 [shape = 'u8[16384]{0}', space=vmem, size = 0x4000, scoped, tag = 'output window, operand 0']
    %9 = vsyncpa [#allocation3], 0
    %s10 = scalar_lea.sflag [#allocation3], 1
    %11 = vsyncpa %s10, 0
    %12 = vsyncpa [#allocation6], 0
    %13 = vsyncpa [#allocation4], 0
    %s14 = scalar_lea.sflag [#allocation4], 1
    %15 = vsyncpa %s14, 0
    loop: start=0, step=1, limit=4
    $region2: #{tpu_custom_call.1} parent=1 // loop_pre_header
      _
    $region3: #{tpu_custom_call.1} parent=1 // loop_header
      %s17 = sphi 0, %s21
      %p18 = scmp.ge.s32.totalorder %s17, 4
      %s27 = sphi 0, %s29
      %s30 = sphi 0, %s27
      %s31 = sphi 0, %s30
      %s47 = sphi 0, %s31
      %s51 = sphi 0, %s51
      %s53 = sphi 0, %s51
      %s54 = sphi 0, %s53
      %s68 = sphi 0, %s54
      %s72 = sphi 0, %s72
      %s74 = sphi 0, %s72
      %s75 = sphi 0, %s74
      %s89 = sphi 0, %s75
      %s93 = sphi 0, %s93
      %s95 = sphi 0, %s93
      %s96 = sphi 0, %s95
      %s110 = sphi 0, %s96
      %s116 = sphi 0, %s118
      %s119 = sphi 0, %s116
      %s120 = sphi 0, %s119
      %s136 = sphi 0, %s120
    $region4: #{tpu_custom_call.1} parent=1 // loop_header_branch
      %20 = sbr.rel (%p18) target = $region8
    $region5: #{tpu_custom_call.1} parent=1 // loop_body
      %s22 = ssub.s32 %s17, 1
      %s23 = ssub.s32 %s17, 2
      %s24 = sadd.s32 %s17, 1
      %s25 = ssub.s32 %s17, %s24
      %p26 = scmp.eq.s32.totalorder %s25, 0
      %s28 = sadd.s32 %s27, 1
      %s29 = scalar_select %p26, %s27, %s28
      %p32 = pneg %p26
      %p33 = scmp.eq.s32.totalorder %s17, 1
      %p34 = por %p32, %p33
      %p35 = scmp.ne.s32.totalorder %s27, %s30
      %p36 = scmp.eq.s32.totalorder %s17, 0
      %p37 = por %p35, %p36
      %p38 = scmp.ne.s32.totalorder %s27, %s30
      %p39 = scmp.eq.s32.totalorder %s22, 1
      %p40 = por %p38, %p39
      %p41 = scmp.ne.s32.totalorder %s30, %s31
      %p42 = scmp.eq.s32.totalorder %s22, 0
      %p43 = por %p41, %p42
      %p44 = scmp.ne.s32.totalorder %s30, %s31
      %p45 = scmp.eq.s32.totalorder %s23, 1
      %p46 = por %p44, %p45
      %p48 = scmp.ne.s32.totalorder %s31, %s47
      %p49 = scmp.eq.s32.totalorder %s23, 0
      %p50 = por %p48, %p49
      %s52 = sadd.s32 %s51, 1
      %p55 = scmp.eq.s32.totalorder %s17, 1
      %p56 = scmp.ne.s32.totalorder %s51, %s53
      %p57 = scmp.eq.s32.totalorder %s17, 0
      %p58 = por %p56, %p57
      %p59 = scmp.ne.s32.totalorder %s51, %s53
      %p60 = scmp.eq.s32.totalorder %s22, 1
      %p61 = por %p59, %p60
      %p62 = scmp.ne.s32.totalorder %s53, %s54
      %p63 = scmp.eq.s32.totalorder %s22, 0
      %p64 = por %p62, %p63
      %p65 = scmp.ne.s32.totalorder %s53, %s54
      %p66 = scmp.eq.s32.totalorder %s23, 1
      %p67 = por %p65, %p66
      %p69 = scmp.ne.s32.totalorder %s54, %s68
      %p70 = scmp.eq.s32.totalorder %s23, 0
      %p71 = por %p69, %p70
      %s73 = sadd.s32 %s72, 1
      %p76 = scmp.eq.s32.totalorder %s17, 1
      %p77 = scmp.ne.s32.totalorder %s72, %s74
      %p78 = scmp.eq.s32.totalorder %s17, 0
      %p79 = por %p77, %p78
      %p80 = scmp.ne.s32.totalorder %s72, %s74
      %p81 = scmp.eq.s32.totalorder %s22, 1
      %p82 = por %p80, %p81
      %p83 = scmp.ne.s32.totalorder %s74, %s75
      %p84 = scmp.eq.s32.totalorder %s22, 0
      %p85 = por %p83, %p84
      %p86 = scmp.ne.s32.totalorder %s74, %s75
      %p87 = scmp.eq.s32.totalorder %s23, 1
      %p88 = por %p86, %p87
      %p90 = scmp.ne.s32.totalorder %s75, %s89
      %p91 = scmp.eq.s32.totalorder %s23, 0
      %p92 = por %p90, %p91
      %s94 = sadd.s32 %s93, 1
      %p97 = scmp.eq.s32.totalorder %s17, 1
      %p98 = scmp.ne.s32.totalorder %s93, %s95
      %p99 = scmp.eq.s32.totalorder %s17, 0
      %p100 = por %p98, %p99
      %p101 = scmp.ne.s32.totalorder %s93, %s95
      %p102 = scmp.eq.s32.totalorder %s22, 1
      %p103 = por %p101, %p102
      %p104 = scmp.ne.s32.totalorder %s95, %s96
      %p105 = scmp.eq.s32.totalorder %s22, 0
      %p106 = por %p104, %p105
      %p107 = scmp.ne.s32.totalorder %s95, %s96
      %p108 = scmp.eq.s32.totalorder %s23, 1
      %p109 = por %p107, %p108
      %p111 = scmp.ne.s32.totalorder %s96, %s110
      %p112 = scmp.eq.s32.totalorder %s23, 0
      %p113 = por %p111, %p112
      %s114 = ssub.s32 %s17, %s24
      %p115 = scmp.eq.s32.totalorder %s114, 0
      %s117 = sadd.s32 %s116, 1
      %s118 = scalar_select %p115, %s116, %s117
      %p121 = pneg %p115
      %p122 = scmp.eq.s32.totalorder %s17, 1
      %p123 = por %p121, %p122
      %p124 = scmp.ne.s32.totalorder %s116, %s119
      %p125 = scmp.eq.s32.totalorder %s17, 0
      %p126 = por %p124, %p125
      %p127 = scmp.ne.s32.totalorder %s116, %s119
      %p128 = scmp.eq.s32.totalorder %s22, 1
      %p129 = por %p127, %p128
      %p130 = scmp.ne.s32.totalorder %s119, %s120
      %p131 = scmp.eq.s32.totalorder %s22, 0
      %p132 = por %p130, %p131
      %p133 = scmp.ne.s32.totalorder %s119, %s120
      %p134 = scmp.eq.s32.totalorder %s23, 1
      %p135 = por %p133, %p134
      %p137 = scmp.ne.s32.totalorder %s120, %s136
      %p138 = scmp.eq.s32.totalorder %s23, 0
      %p139 = por %p137, %p138
      %p140 = scmp.le.s32.totalorder 1, %s17
      %p141 = scmp.lt.s32.totalorder %s17, 3
      %p142 = pnand %p140, %p141
      %p143 = pneg %p142
      // Predicated region
      $region9: #{tpu_custom_call.1} parent=5 // pred_check
        _
      $region10: #{tpu_custom_call.1} parent=5 // pred_check_branch
        %145 = sbr.rel (%p142) target = $region12
      $region11: #{tpu_custom_call.1} parent=5 // pred_region
        %s146 = ssub.s32 %s17, 1
        // Predicated region
        $region13: #{tpu_custom_call.1} parent=11 // pred_check
          %p147 = pneg %p64
        $region14: #{tpu_custom_call.1} parent=11 // pred_check_branch
          %149 = sbr.rel (%p147) target = $region16
        $region15: #{tpu_custom_call.1} parent=11 // pred_region
          %s151 = ssub.s32 1024, 1024
          %152 = vsyncadd [#allocation6], %s151
          %s153 = sshll.u32 [#allocation5], 4
          %s154 = int_to_ptr.vmem [resolvable:$true] %s153
          %159 = dma.hbm_to_vmem [thread:$0]  %s1, 1024, %s154, [#allocation6], 128, 128, 8
        $region16: #{tpu_custom_call.1} parent=11 // pred_fallthru
          _
        // Predicated region
        $region17: #{tpu_custom_call.1} parent=11 // pred_check
          %p160 = pneg %p85
        $region18: #{tpu_custom_call.1} parent=11 // pred_check_branch
          %162 = sbr.rel (%p160) target = $region20
        $region19: #{tpu_custom_call.1} parent=11 // pred_region
          %s164 = ssub.s32 8192, 8192
          %165 = vsyncadd [#allocation6], %s164
          %s166 = sshll.u32 [#allocation7], 4
          %s167 = int_to_ptr.vmem [resolvable:$true] %s166
          %172 = dma.hbm_to_vmem [thread:$0]  %s2, 8192, %s167, [#allocation6], 128, 128, 8
        $region20: #{tpu_custom_call.1} parent=11 // pred_fallthru
          _
        // Predicated region
        $region21: #{tpu_custom_call.1} parent=11 // pred_check
          %p173 = pneg %p106
        $region22: #{tpu_custom_call.1} parent=11 // pred_check_branch
          %175 = sbr.rel (%p173) target = $region24
        $region23: #{tpu_custom_call.1} parent=11 // pred_region
          _
        $region24: #{tpu_custom_call.1} parent=11 // pred_fallthru
          _
      $region12: #{tpu_custom_call.1} parent=5 // pred_fallthru
        _
      %p176 = scmp.lt.s32.totalorder %s17, 2
      // Predicated region
      $region25: #{tpu_custom_call.1} parent=5 // pred_check
        %p177 = pneg %p176
      $region26: #{tpu_custom_call.1} parent=5 // pred_check_branch
        %179 = sbr.rel (%p177) target = $region28
      $region27: #{tpu_custom_call.1} parent=5 // pred_region
        // Predicated region
        $region29: #{tpu_custom_call.1} parent=27 // pred_check
          %p180 = pneg %p37
        $region30: #{tpu_custom_call.1} parent=27 // pred_check_branch
          %182 = sbr.rel (%p180) target = $region32
        $region31: #{tpu_custom_call.1} parent=27 // pred_region
          %s183 = sand.u32 %s27, 1
          %s184 = scalar_lea.sflag [#allocation3], %s183
          %s185 = sand.u32 %s27, 1
          %s186 = smul.addr %s185, 16
          %s187 = scalar_lea.vmem [#allocation2], %s186
          %s189 = ssub.s32 256, 256
          %190 = vsyncadd %s184, %s189
          %s191 = smul.addr %s17, 2
          %s192 = smul.addr %s191, 128
          %s193 = scalar_lea.hbm %s0, %s192
          %s194 = sshll.u32 %s187, 4
          %s195 = int_to_ptr.vmem [resolvable:$true] %s194
          %200 = dma.hbm_to_vmem [thread:$0]  %s193, 256, %s195, %s184, 128, 128, 8
        $region32: #{tpu_custom_call.1} parent=27 // pred_fallthru
          _
      $region28: #{tpu_custom_call.1} parent=5 // pred_fallthru
        _
      %p201 = scmp.le.s32.totalorder 1, %s17
      %p202 = scmp.lt.s32.totalorder %s17, 3
      %p203 = pnand %p201, %p202
      %p204 = pneg %p203
      // Predicated region
      $region33: #{tpu_custom_call.1} parent=5 // pred_check
        _
      $region34: #{tpu_custom_call.1} parent=5 // pred_check_branch
        %206 = sbr.rel (%p203) target = $region36
      $region35: #{tpu_custom_call.1} parent=5 // pred_region
        %s207 = ssub.s32 %s17, 1
        %s208 = sand.u32 %s30, 1
        %s209 = scalar_lea.sflag [#allocation3], %s208
        %s210 = sand.u32 %s30, 1
        %s211 = smul.addr %s210, 16
        %s212 = scalar_lea.vmem [#allocation2], %s211
        // Predicated region
        $region37: #{tpu_custom_call.1} parent=35 // pred_check
          %p213 = pneg %p43
        $region38: #{tpu_custom_call.1} parent=35 // pred_check_branch
          %215 = sbr.rel (%p213) target = $region40
        $region39: #{tpu_custom_call.1} parent=35 // pred_region
          %216 = dma.done %s209, 256
        $region40: #{tpu_custom_call.1} parent=35 // pred_fallthru
          _
        // Predicated region
        $region41: #{tpu_custom_call.1} parent=35 // pred_check
          %p217 = pneg %p64
        $region42: #{tpu_custom_call.1} parent=35 // pred_check_branch
          %219 = sbr.rel (%p217) target = $region44
        $region43: #{tpu_custom_call.1} parent=35 // pred_region
          %220 = dma.done [#allocation6], 1024
        $region44: #{tpu_custom_call.1} parent=35 // pred_fallthru
          _
        // Predicated region
        $region45: #{tpu_custom_call.1} parent=35 // pred_check
          %p221 = pneg %p85
        $region46: #{tpu_custom_call.1} parent=35 // pred_check_branch
          %223 = sbr.rel (%p221) target = $region48
        $region47: #{tpu_custom_call.1} parent=35 // pred_region
          %224 = dma.done [#allocation6], 8192
        $region48: #{tpu_custom_call.1} parent=35 // pred_fallthru
          _
        %s225 = sand.u32 %s30, 1
        %s226 = scalar_lea.sflag [#allocation3], %s225
        %s227 = sand.u32 %s30, 1
        %s228 = smul.addr %s227, 16
        %s229 = scalar_lea.vmem [#allocation2], %s228
        %p230 = pneg %p43
        %p231 = pneg %p40
        %p232 = pneg %p64
        %p233 = pneg %p61
        %p234 = pneg %p85
        %p235 = pneg %p82
        %p236 = pneg %p106
        %p237 = pneg %p103
        %p238 = pneg %p132
        %p239 = pneg %p129
        %s240 = sand.u32 %s119, 1
        %s241 = scalar_lea.sflag [#allocation4], %s240
        %s242 = sand.u32 %s119, 1
        %s243 = smul.addr %s242, 16
        %s244 = scalar_lea.vmem [#allocation8], %s243
        %v245 = vld [vmem:[%s212] sm:$0xff]
        %v246 = vld [vmem:[%s212 + $0x8] sm:$0xff]
        %vm249 = vcmask 1046528
        %v250 = vrot.slane %v245, 1
        %v251 = vrot.slane %v246, 1
        %v252 = vsel %vm249, %v250, %v251
        %v256 = vsel %vm249, %v251, %v250
        %v257 = vmax.f32 %v245, %v252
        %v258 = vmax.f32 %v246, %v256
        %vm259 = vcmask 1045504
        %v260 = vrot.slane %v245, 2
        %v261 = vrot.slane %v246, 2
        %v262 = vsel %vm259, %v260, %v261
        %v266 = vsel %vm259, %v261, %v260
        %v267 = vmax.f32 %v257, %v262
        %v268 = vmax.f32 %v258, %v266
        %vm269 = vcmask 1044480
        %v270 = vrot.slane %v245, 3
        %v271 = vrot.slane %v246, 3
        %v272 = vsel %vm269, %v270, %v271
        %v276 = vsel %vm269, %v271, %v270
        %v277 = vmax.f32 %v267, %v272
        %v278 = vmax.f32 %v268, %v276
        %vm279 = vcmask 1043456
        %v280 = vrot.slane %v245, 4
        %v281 = vrot.slane %v246, 4
        %v282 = vsel %vm279, %v280, %v281
        %v286 = vsel %vm279, %v281, %v280
        %v287 = vmax.f32 %v277, %v282
        %v288 = vmax.f32 %v278, %v286
        %vm289 = vcmask 1042432
        %v290 = vrot.slane %v245, 5
        %v291 = vrot.slane %v246, 5
        %v292 = vsel %vm289, %v290, %v291
        %v296 = vsel %vm289, %v291, %v290
        %v297 = vmax.f32 %v287, %v292
        %v298 = vmax.f32 %v288, %v296
        %301 = vrot.lane.b32.xlu0 %v257, 120
        %v302 = vpop.permute.xlu0 %301
        %303 = vrot.lane.b32.xlu0 %v258, 120
        %v304 = vpop.permute.xlu0 %303
        %v307 = vmax.f32 %v257, %v302
        %v308 = vmax.f32 %v258, %v304
        %v309 = vld [vmem:[#allocation5] sm:$0xff]
        %v310 = vld [vmem:[#allocation5 + $0x8] sm:$0xff]
        %vm311 = vcmask 130048
        %v313 = vsel %vm311, %v309, 0
        %v316 = vsel %vm311, %v310, 0
        %318 = vmatprep.subr.mxu0 0.0
        %319 = vmatpush1.msra.mxu0 %v307
        %320 = vmatprep.subr.mxu0 0.0
        %321 = vmatpush1.msra.mxu0 %v308
        %322 = vmatprep.subr.mxu0 0.0
        %323 = vmatpush1.msra.mxu0 0.0
        %324 = vmatprep.subr.mxu0 0.0
        %325 = vmatpush1.msra.mxu0 0.0
        %326 = vmatprep.subr.mxu0 0.0
        %327 = vmatpush1.msra.mxu0 0.0
        %328 = vmatprep.subr.mxu0 0.0
        %329 = vmatpush1.msra.mxu0 0.0
        %330 = vmatprep.subr.mxu0 0.0
        %331 = vmatpush1.msra.mxu0 0.0
        %332 = vmatprep.subr.mxu0 0.0
        %333 = vmatpush1.msra.mxu0 0.0
        %334 = vmatprep.subr.mxu0 0.0
        %335 = vmatpush1.msra.mxu0 0.0
        %336 = vmatprep.subr.mxu0 0.0
        %337 = vmatpush1.msra.mxu0 0.0
        %338 = vmatprep.subr.mxu0 0.0
        %339 = vmatpush1.msra.mxu0 0.0
        %340 = vmatprep.subr.mxu0 0.0
        %341 = vmatpush1.msra.mxu0 0.0
        %342 = vmatprep.subr.mxu0 0.0
        %343 = vmatpush1.msra.mxu0 0.0
        %344 = vmatprep.subr.mxu0 0.0
        %345 = vmatpush1.msra.mxu0 0.0
        %346 = vmatprep.subr.mxu0 0.0
        %347 = vmatpush1.msra.mxu0 0.0
        %348 = vmatprep.subr.mxu0 0.0
        %349 = vmatpush1.msra.mxu0 0.0
        %350 = vmatprep.subr.mxu0 0.0
        %351 = vmatpush1.msra.mxu0 0.0
        %352 = vmatprep.subr.mxu0 0.0
        %353 = vmatpush1.msra.mxu0 0.0
        %354 = vmatprep.subr.mxu0 0.0
        %355 = vmatpush1.msra.mxu0 0.0
        %356 = vmatprep.subr.mxu0 0.0
        %357 = vmatpush1.msra.mxu0 0.0
        %358 = vmatprep.subr.mxu0 0.0
        %359 = vmatpush1.msra.mxu0 0.0
        %360 = vmatprep.subr.mxu0 0.0
        %361 = vmatpush1.msra.mxu0 0.0
        %362 = vmatprep.subr.mxu0 0.0
        %363 = vmatpush1.msra.mxu0 0.0
        %364 = vmatprep.subr.mxu0 0.0
        %365 = vmatpush1.msra.mxu0 0.0
        %366 = vmatprep.subr.mxu0 0.0
        %367 = vmatpush1.msra.mxu0 0.0
        %368 = vmatprep.subr.mxu0 0.0
        %369 = vmatpush1.msra.mxu0 0.0
        %370 = vmatprep.subr.mxu0 0.0
        %371 = vmatpush1.msra.mxu0 0.0
        %372 = vmatprep.subr.mxu0 0.0
        %373 = vmatpush1.msra.mxu0 0.0
        %374 = vmatprep.subr.mxu0 0.0
        %375 = vmatpush1.msra.mxu0 0.0
        %376 = vmatprep.subr.mxu0 0.0
        %377 = vmatpush1.msra.mxu0 0.0
        %378 = vmatprep.subr.mxu0 0.0
        %379 = vmatpush1.msra.mxu0 0.0
        %380 = vmatprep.subr.mxu0 0.0
        %381 = vmatpush1.msra.mxu0 0.0
        %382 = vmatprep.mubr.f32.mxu0 0.0
        %383 = vmatmul.mubr.f32.gmra.mrb[0].mxu0 %v313
        %v384 = vpop.f32.mrb[0].mxu0
        %v385 = vadd.f32 0.0, %v384
        %v386 = vpop.f32.mrb[0].mxu0
        %387 = vmatprep.mubr.f32.mxu0 0.0
        %388 = vmatmul.mubr.f32.gmra.mrb[0].mxu0 %v316
        %v389 = vpop.f32.mrb[0].mxu0
        %v390 = vadd.f32 0.0, %v389
        %v391 = vpop.f32.mrb[0].mxu0
        %392 = vdwg.mxu0
        %395 = vrot.lane.b32.xlu0 %v267, 120
        %v396 = vpop.permute.xlu0 %395
        %397 = vrot.lane.b32.xlu0 %v268, 120
        %v398 = vpop.permute.xlu0 %397
        %v401 = vmax.f32 %v267, %v396
        %v402 = vmax.f32 %v268, %v398
        %403 = vrot.lane.b32.xlu0 %v267, 112
        %v404 = vpop.permute.xlu0 %403
        %405 = vrot.lane.b32.xlu0 %v268, 112
        %v406 = vpop.permute.xlu0 %405
        %v409 = vmax.f32 %v401, %v404
        %v410 = vmax.f32 %v402, %v406
        %s411 = scalar_lea.vmem [#allocation5], 16
        %v412 = vld [vmem:[%s411] sm:$0xff]
        %v413 = vld [vmem:[%s411 + $0x8] sm:$0xff]
        %v415 = vsel %vm311, %v412, 0
        %v418 = vsel %vm311, %v413, 0
        %420 = vmatprep.subr.mxu0 0.0
        %421 = vmatpush1.msra.mxu0 %v409
        %422 = vmatprep.subr.mxu0 0.0
        %423 = vmatpush1.msra.mxu0 %v410
        %424 = vmatprep.subr.mxu0 0.0
        %425 = vmatpush1.msra.mxu0 0.0
        %426 = vmatprep.subr.mxu0 0.0
        %427 = vmatpush1.msra.mxu0 0.0
        %428 = vmatprep.subr.mxu0 0.0
        %429 = vmatpush1.msra.mxu0 0.0
        %430 = vmatprep.subr.mxu0 0.0
        %431 = vmatpush1.msra.mxu0 0.0
        %432 = vmatprep.subr.mxu0 0.0
        %433 = vmatpush1.msra.mxu0 0.0
        %434 = vmatprep.subr.mxu0 0.0
        %435 = vmatpush1.msra.mxu0 0.0
        %436 = vmatprep.subr.mxu0 0.0
        %437 = vmatpush1.msra.mxu0 0.0
        %438 = vmatprep.subr.mxu0 0.0
        %439 = vmatpush1.msra.mxu0 0.0
        %440 = vmatprep.subr.mxu0 0.0
        %441 = vmatpush1.msra.mxu0 0.0
        %442 = vmatprep.subr.mxu0 0.0
        %443 = vmatpush1.msra.mxu0 0.0
        %444 = vmatprep.subr.mxu0 0.0
        %445 = vmatpush1.msra.mxu0 0.0
        %446 = vmatprep.subr.mxu0 0.0
        %447 = vmatpush1.msra.mxu0 0.0
        %448 = vmatprep.subr.mxu0 0.0
        %449 = vmatpush1.msra.mxu0 0.0
        %450 = vmatprep.subr.mxu0 0.0
        %451 = vmatpush1.msra.mxu0 0.0
        %452 = vmatprep.subr.mxu0 0.0
        %453 = vmatpush1.msra.mxu0 0.0
        %454 = vmatprep.subr.mxu0 0.0
        %455 = vmatpush1.msra.mxu0 0.0
        %456 = vmatprep.subr.mxu0 0.0
        %457 = vmatpush1.msra.mxu0 0.0
        %458 = vmatprep.subr.mxu0 0.0
        %459 = vmatpush1.msra.mxu0 0.0
        %460 = vmatprep.subr.mxu0 0.0
        %461 = vmatpush1.msra.mxu0 0.0
        %462 = vmatprep.subr.mxu0 0.0
        %463 = vmatpush1.msra.mxu0 0.0
        %464 = vmatprep.subr.mxu0 0.0
        %465 = vmatpush1.msra.mxu0 0.0
        %466 = vmatprep.subr.mxu0 0.0
        %467 = vmatpush1.msra.mxu0 0.0
        %468 = vmatprep.subr.mxu0 0.0
        %469 = vmatpush1.msra.mxu0 0.0
        %470 = vmatprep.subr.mxu0 0.0
        %471 = vmatpush1.msra.mxu0 0.0
        %472 = vmatprep.subr.mxu0 0.0
        %473 = vmatpush1.msra.mxu0 0.0
        %474 = vmatprep.subr.mxu0 0.0
        %475 = vmatpush1.msra.mxu0 0.0
        %476 = vmatprep.subr.mxu0 0.0
        %477 = vmatpush1.msra.mxu0 0.0
        %478 = vmatprep.subr.mxu0 0.0
        %479 = vmatpush1.msra.mxu0 0.0
        %480 = vmatprep.subr.mxu0 0.0
        %481 = vmatpush1.msra.mxu0 0.0
        %482 = vmatprep.subr.mxu0 0.0
        %483 = vmatpush1.msra.mxu0 0.0
        %484 = vmatprep.mubr.f32.mxu0 0.0
        %485 = vmatmul.mubr.f32.gmra.mrb[0].mxu0 %v415
        %v486 = vpop.f32.mrb[0].mxu0
        %v487 = vadd.f32 0.0, %v486
        %v488 = vpop.f32.mrb[0].mxu0
        %489 = vmatprep.mubr.f32.mxu0 0.0
        %490 = vmatmul.mubr.f32.gmra.mrb[0].mxu0 %v418
        %v491 = vpop.f32.mrb[0].mxu0
        %v492 = vadd.f32 0.0, %v491
        %v493 = vpop.f32.mrb[0].mxu0
        %494 = vdwg.mxu0
        %497 = vrot.lane.b32.xlu0 %v287, 120
        %v498 = vpop.permute.xlu0 %497
        %499 = vrot.lane.b32.xlu0 %v288, 120
        %v500 = vpop.permute.xlu0 %499
        %v503 = vmax.f32 %v287, %v498
        %v504 = vmax.f32 %v288, %v500
        %505 = vrot.lane.b32.xlu0 %v287, 112
        %v506 = vpop.permute.xlu0 %505
        %507 = vrot.lane.b32.xlu0 %v288, 112
        %v508 = vpop.permute.xlu0 %507
        %v511 = vmax.f32 %v503, %v506
        %v512 = vmax.f32 %v504, %v508
        %513 = vrot.lane.b32.xlu0 %v287, 104
        %v514 = vpop.permute.xlu0 %513
        %515 = vrot.lane.b32.xlu0 %v288, 104
        %v516 = vpop.permute.xlu0 %515
        %v519 = vmax.f32 %v511, %v514
        %v520 = vmax.f32 %v512, %v516
        %521 = vrot.lane.b32.xlu0 %v287, 96
        %v522 = vpop.permute.xlu0 %521
        %523 = vrot.lane.b32.xlu0 %v288, 96
        %v524 = vpop.permute.xlu0 %523
        %v527 = vmax.f32 %v519, %v522
        %v528 = vmax.f32 %v520, %v524
        %s529 = scalar_lea.vmem [#allocation5], 32
        %v530 = vld [vmem:[%s529] sm:$0xff]
        %v531 = vld [vmem:[%s529 + $0x8] sm:$0xff]
        %v533 = vsel %vm311, %v530, 0
        %v536 = vsel %vm311, %v531, 0
        %538 = vmatprep.subr.mxu0 0.0
        %539 = vmatpush1.msra.mxu0 %v527
        %540 = vmatprep.subr.mxu0 0.0
        %541 = vmatpush1.msra.mxu0 %v528
        %542 = vmatprep.subr.mxu0 0.0
        %543 = vmatpush1.msra.mxu0 0.0
        %544 = vmatprep.subr.mxu0 0.0
        %545 = vmatpush1.msra.mxu0 0.0
        %546 = vmatprep.subr.mxu0 0.0
        %547 = vmatpush1.msra.mxu0 0.0
        %548 = vmatprep.subr.mxu0 0.0
        %549 = vmatpush1.msra.mxu0 0.0
        %550 = vmatprep.subr.mxu0 0.0
        %551 = vmatpush1.msra.mxu0 0.0
        %552 = vmatprep.subr.mxu0 0.0
        %553 = vmatpush1.msra.mxu0 0.0
        %554 = vmatprep.subr.mxu0 0.0
        %555 = vmatpush1.msra.mxu0 0.0
        %556 = vmatprep.subr.mxu0 0.0
        %557 = vmatpush1.msra.mxu0 0.0
        %558 = vmatprep.subr.mxu0 0.0
        %559 = vmatpush1.msra.mxu0 0.0
        %560 = vmatprep.subr.mxu0 0.0
        %561 = vmatpush1.msra.mxu0 0.0
        %562 = vmatprep.subr.mxu0 0.0
        %563 = vmatpush1.msra.mxu0 0.0
        %564 = vmatprep.subr.mxu0 0.0
        %565 = vmatpush1.msra.mxu0 0.0
        %566 = vmatprep.subr.mxu0 0.0
        %567 = vmatpush1.msra.mxu0 0.0
        %568 = vmatprep.subr.mxu0 0.0
        %569 = vmatpush1.msra.mxu0 0.0
        %570 = vmatprep.subr.mxu0 0.0
        %571 = vmatpush1.msra.mxu0 0.0
        %572 = vmatprep.subr.mxu0 0.0
        %573 = vmatpush1.msra.mxu0 0.0
        %574 = vmatprep.subr.mxu0 0.0
        %575 = vmatpush1.msra.mxu0 0.0
        %576 = vmatprep.subr.mxu0 0.0
        %577 = vmatpush1.msra.mxu0 0.0
        %578 = vmatprep.subr.mxu0 0.0
        %579 = vmatpush1.msra.mxu0 0.0
        %580 = vmatprep.subr.mxu0 0.0
        %581 = vmatpush1.msra.mxu0 0.0
        %582 = vmatprep.subr.mxu0 0.0
        %583 = vmatpush1.msra.mxu0 0.0
        %584 = vmatprep.subr.mxu0 0.0
        %585 = vmatpush1.msra.mxu0 0.0
        %586 = vmatprep.subr.mxu0 0.0
        %587 = vmatpush1.msra.mxu0 0.0
        %588 = vmatprep.subr.mxu0 0.0
        %589 = vmatpush1.msra.mxu0 0.0
        %590 = vmatprep.subr.mxu0 0.0
        %591 = vmatpush1.msra.mxu0 0.0
        %592 = vmatprep.subr.mxu0 0.0
        %593 = vmatpush1.msra.mxu0 0.0
        %594 = vmatprep.subr.mxu0 0.0
        %595 = vmatpush1.msra.mxu0 0.0
        %596 = vmatprep.subr.mxu0 0.0
        %597 = vmatpush1.msra.mxu0 0.0
        %598 = vmatprep.subr.mxu0 0.0
        %599 = vmatpush1.msra.mxu0 0.0
        %600 = vmatprep.subr.mxu0 0.0
        %601 = vmatpush1.msra.mxu0 0.0
        %602 = vmatprep.mubr.f32.mxu0 0.0
        %603 = vmatmul.mubr.f32.gmra.mrb[0].mxu0 %v533
        %v604 = vpop.f32.mrb[0].mxu0
        %v605 = vadd.f32 0.0, %v604
        %v606 = vpop.f32.mrb[0].mxu0
        %607 = vmatprep.mubr.f32.mxu0 0.0
        %608 = vmatmul.mubr.f32.gmra.mrb[0].mxu0 %v536
        %v609 = vpop.f32.mrb[0].mxu0
        %v610 = vadd.f32 0.0, %v609
        %v611 = vpop.f32.mrb[0].mxu0
        %612 = vdwg.mxu0
        %615 = vrot.lane.b32.xlu0 %v297, 120
        %v616 = vpop.permute.xlu0 %615
        %617 = vrot.lane.b32.xlu0 %v298, 120
        %v618 = vpop.permute.xlu0 %617
        %v621 = vmax.f32 %v297, %v616
        %v622 = vmax.f32 %v298, %v618
        %623 = vrot.lane.b32.xlu0 %v297, 112
        %v624 = vpop.permute.xlu0 %623
        %625 = vrot.lane.b32.xlu0 %v298, 112
        %v626 = vpop.permute.xlu0 %625
        %v629 = vmax.f32 %v621, %v624
        %v630 = vmax.f32 %v622, %v626
        %631 = vrot.lane.b32.xlu0 %v297, 104
        %v632 = vpop.permute.xlu0 %631
        %633 = vrot.lane.b32.xlu0 %v298, 104
        %v634 = vpop.permute.xlu0 %633
        %v637 = vmax.f32 %v629, %v632
        %v638 = vmax.f32 %v630, %v634
        %639 = vrot.lane.b32.xlu0 %v297, 96
        %v640 = vpop.permute.xlu0 %639
        %641 = vrot.lane.b32.xlu0 %v298, 96
        %v642 = vpop.permute.xlu0 %641
        %v645 = vmax.f32 %v637, %v640
        %v646 = vmax.f32 %v638, %v642
        %647 = vrot.lane.b32.xlu0 %v297, 88
        %v648 = vpop.permute.xlu0 %647
        %649 = vrot.lane.b32.xlu0 %v298, 88
        %v650 = vpop.permute.xlu0 %649
        %v653 = vmax.f32 %v645, %v648
        %v654 = vmax.f32 %v646, %v650
        %s655 = scalar_lea.vmem [#allocation5], 48
        %v656 = vld [vmem:[%s655] sm:$0xff]
        %v657 = vld [vmem:[%s655 + $0x8] sm:$0xff]
        %v659 = vsel %vm311, %v656, 0
        %v662 = vsel %vm311, %v657, 0
        %664 = vmatprep.subr.mxu0 0.0
        %665 = vmatpush1.msra.mxu0 %v653
        %666 = vmatprep.subr.mxu0 0.0
        %667 = vmatpush1.msra.mxu0 %v654
        %668 = vmatprep.subr.mxu0 0.0
        %669 = vmatpush1.msra.mxu0 0.0
        %670 = vmatprep.subr.mxu0 0.0
        %671 = vmatpush1.msra.mxu0 0.0
        %672 = vmatprep.subr.mxu0 0.0
        %673 = vmatpush1.msra.mxu0 0.0
        %674 = vmatprep.subr.mxu0 0.0
        %675 = vmatpush1.msra.mxu0 0.0
        %676 = vmatprep.subr.mxu0 0.0
        %677 = vmatpush1.msra.mxu0 0.0
        %678 = vmatprep.subr.mxu0 0.0
        %679 = vmatpush1.msra.mxu0 0.0
        %680 = vmatprep.subr.mxu0 0.0
        %681 = vmatpush1.msra.mxu0 0.0
        %682 = vmatprep.subr.mxu0 0.0
        %683 = vmatpush1.msra.mxu0 0.0
        %684 = vmatprep.subr.mxu0 0.0
        %685 = vmatpush1.msra.mxu0 0.0
        %686 = vmatprep.subr.mxu0 0.0
        %687 = vmatpush1.msra.mxu0 0.0
        %688 = vmatprep.subr.mxu0 0.0
        %689 = vmatpush1.msra.mxu0 0.0
        %690 = vmatprep.subr.mxu0 0.0
        %691 = vmatpush1.msra.mxu0 0.0
        %692 = vmatprep.subr.mxu0 0.0
        %693 = vmatpush1.msra.mxu0 0.0
        %694 = vmatprep.subr.mxu0 0.0
        %695 = vmatpush1.msra.mxu0 0.0
        %696 = vmatprep.subr.mxu0 0.0
        %697 = vmatpush1.msra.mxu0 0.0
        %698 = vmatprep.subr.mxu0 0.0
        %699 = vmatpush1.msra.mxu0 0.0
        %700 = vmatprep.subr.mxu0 0.0
        %701 = vmatpush1.msra.mxu0 0.0
        %702 = vmatprep.subr.mxu0 0.0
        %703 = vmatpush1.msra.mxu0 0.0
        %704 = vmatprep.subr.mxu0 0.0
        %705 = vmatpush1.msra.mxu0 0.0
        %706 = vmatprep.subr.mxu0 0.0
        %707 = vmatpush1.msra.mxu0 0.0
        %708 = vmatprep.subr.mxu0 0.0
        %709 = vmatpush1.msra.mxu0 0.0
        %710 = vmatprep.subr.mxu0 0.0
        %711 = vmatpush1.msra.mxu0 0.0
        %712 = vmatprep.subr.mxu0 0.0
        %713 = vmatpush1.msra.mxu0 0.0
        %714 = vmatprep.subr.mxu0 0.0
        %715 = vmatpush1.msra.mxu0 0.0
        %716 = vmatprep.subr.mxu0 0.0
        %717 = vmatpush1.msra.mxu0 0.0
        %718 = vmatprep.subr.mxu0 0.0
        %719 = vmatpush1.msra.mxu0 0.0
        %720 = vmatprep.subr.mxu0 0.0
        %721 = vmatpush1.msra.mxu0 0.0
        %722 = vmatprep.subr.mxu0 0.0
        %723 = vmatpush1.msra.mxu0 0.0
        %724 = vmatprep.subr.mxu0 0.0
        %725 = vmatpush1.msra.mxu0 0.0
        %726 = vmatprep.subr.mxu0 0.0
        %727 = vmatpush1.msra.mxu0 0.0
        %728 = vmatprep.mubr.f32.mxu0 0.0
        %729 = vmatmul.mubr.f32.gmra.mrb[0].mxu0 %v659
        %v730 = vpop.f32.mrb[0].mxu0
        %v731 = vadd.f32 0.0, %v730
        %v732 = vpop.f32.mrb[0].mxu0
        %733 = vmatprep.mubr.f32.mxu0 0.0
        %734 = vmatmul.mubr.f32.gmra.mrb[0].mxu0 %v662
        %v735 = vpop.f32.mrb[0].mxu0
        %v736 = vadd.f32 0.0, %v735
        %v737 = vpop.f32.mrb[0].mxu0
        %738 = vdwg.mxu0
        %v739 = vld [vmem:[%s3] sm:$0x1]
        %v741 = vlaneseq
        %v742 = vshrl.u32 %v741, 7
        %v743 = vsub.s32 0, %v742
        %v744 = vrot.slane %v739, %v743
        %v746 = vadd.f32 %v245, %v744
        %v747 = vadd.f32 %v246, %v744
        %v748 = vld [vmem:[#allocation7] sm:$0xff]
        %v749 = vld [vmem:[#allocation7 + $0x8] sm:$0xff]
        %v750 = vld [vmem:[#allocation7 + $0x10] sm:$0xff]
        %v751 = vld [vmem:[#allocation7 + $0x18] sm:$0xff]
        %v752 = vld [vmem:[#allocation7 + $0x20] sm:$0xff]
        %v753 = vld [vmem:[#allocation7 + $0x28] sm:$0xff]
        %v754 = vld [vmem:[#allocation7 + $0x30] sm:$0xff]
        %v755 = vld [vmem:[#allocation7 + $0x38] sm:$0xff]
        %v756 = vld [vmem:[#allocation7 + $0x40] sm:$0xff]
        %v757 = vld [vmem:[#allocation7 + $0x48] sm:$0xff]
        %v758 = vld [vmem:[#allocation7 + $0x50] sm:$0xff]
        %v759 = vld [vmem:[#allocation7 + $0x58] sm:$0xff]
        %v760 = vld [vmem:[#allocation7 + $0x60] sm:$0xff]
        %v761 = vld [vmem:[#allocation7 + $0x68] sm:$0xff]
        %v762 = vld [vmem:[#allocation7 + $0x70] sm:$0xff]
        %v763 = vld [vmem:[#allocation7 + $0x78] sm:$0xff]
        %v764 = vld [vmem:[#allocation7 + $0x80] sm:$0xff]
        %v765 = vld [vmem:[#allocation7 + $0x88] sm:$0xff]
        %v766 = vld [vmem:[#allocation7 + $0x90] sm:$0xff]
        %v767 = vld [vmem:[#allocation7 + $0x98] sm:$0xff]
        %v768 = vld [vmem:[#allocation7 + $0xa0] sm:$0xff]
        %v769 = vld [vmem:[#allocation7 + $0xa8] sm:$0xff]
        %v770 = vld [vmem:[#allocation7 + $0xb0] sm:$0xff]
        %v771 = vld [vmem:[#allocation7 + $0xb8] sm:$0xff]
        %v772 = vld [vmem:[#allocation7 + $0xc0] sm:$0xff]
        %v773 = vld [vmem:[#allocation7 + $0xc8] sm:$0xff]
        %v774 = vld [vmem:[#allocation7 + $0xd0] sm:$0xff]
        %v775 = vld [vmem:[#allocation7 + $0xd8] sm:$0xff]
        %v776 = vld [vmem:[#allocation7 + $0xe0] sm:$0xff]
        %v777 = vld [vmem:[#allocation7 + $0xe8] sm:$0xff]
        %v778 = vld [vmem:[#allocation7 + $0xf0] sm:$0xff]
        %v779 = vld [vmem:[#allocation7 + $0xf8] sm:$0xff]
        %v780 = vld [vmem:[#allocation7 + $0x100] sm:$0xff]
        %v781 = vld [vmem:[#allocation7 + $0x108] sm:$0xff]
        %v782 = vld [vmem:[#allocation7 + $0x110] sm:$0xff]
        %v783 = vld [vmem:[#allocation7 + $0x118] sm:$0xff]
        %v784 = vld [vmem:[#allocation7 + $0x120] sm:$0xff]
        %v785 = vld [vmem:[#allocation7 + $0x128] sm:$0xff]
        %v786 = vld [vmem:[#allocation7 + $0x130] sm:$0xff]
        %v787 = vld [vmem:[#allocation7 + $0x138] sm:$0xff]
        %v788 = vld [vmem:[#allocation7 + $0x140] sm:$0xff]
        %v789 = vld [vmem:[#allocation7 + $0x148] sm:$0xff]
        %v790 = vld [vmem:[#allocation7 + $0x150] sm:$0xff]
        %v791 = vld [vmem:[#allocation7 + $0x158] sm:$0xff]
        %v792 = vld [vmem:[#allocation7 + $0x160] sm:$0xff]
        %v793 = vld [vmem:[#allocation7 + $0x168] sm:$0xff]
        %v794 = vld [vmem:[#allocation7 + $0x170] sm:$0xff]
        %v795 = vld [vmem:[#allocation7 + $0x178] sm:$0xff]
        %v796 = vld [vmem:[#allocation7 + $0x180] sm:$0xff]
        %v797 = vld [vmem:[#allocation7 + $0x188] sm:$0xff]
        %v798 = vld [vmem:[#allocation7 + $0x190] sm:$0xff]
        %v799 = vld [vmem:[#allocation7 + $0x198] sm:$0xff]
        %v800 = vld [vmem:[#allocation7 + $0x1a0] sm:$0xff]
        %v801 = vld [vmem:[#allocation7 + $0x1a8] sm:$0xff]
        %v802 = vld [vmem:[#allocation7 + $0x1b0] sm:$0xff]
        %v803 = vld [vmem:[#allocation7 + $0x1b8] sm:$0xff]
        %v804 = vld [vmem:[#allocation7 + $0x1c0] sm:$0xff]
        %v805 = vld [vmem:[#allocation7 + $0x1c8] sm:$0xff]
        %v806 = vld [vmem:[#allocation7 + $0x1d0] sm:$0xff]
        %v807 = vld [vmem:[#allocation7 + $0x1d8] sm:$0xff]
        %v808 = vld [vmem:[#allocation7 + $0x1e0] sm:$0xff]
        %v809 = vld [vmem:[#allocation7 + $0x1e8] sm:$0xff]
        %v810 = vld [vmem:[#allocation7 + $0x1f0] sm:$0xff]
        %v811 = vld [vmem:[#allocation7 + $0x1f8] sm:$0xff]
        %812 = vmatprep.subr.mxu0 0.0
        %813 = vmatpush1.msra.mxu0 %v748
        %814 = vmatprep.subr.mxu0 0.0
        %815 = vmatpush1.msra.mxu0 %v749
        %816 = vmatprep.subr.mxu0 0.0
        %817 = vmatpush1.msra.mxu0 %v750
        %818 = vmatprep.subr.mxu0 0.0
        %819 = vmatpush1.msra.mxu0 %v751
        %820 = vmatprep.subr.mxu0 0.0
        %821 = vmatpush1.msra.mxu0 %v752
        %822 = vmatprep.subr.mxu0 0.0
        %823 = vmatpush1.msra.mxu0 %v753
        %824 = vmatprep.subr.mxu0 0.0
        %825 = vmatpush1.msra.mxu0 %v754
        %826 = vmatprep.subr.mxu0 0.0
        %827 = vmatpush1.msra.mxu0 %v755
        %828 = vmatprep.subr.mxu0 0.0
        %829 = vmatpush1.msra.mxu0 %v756
        %830 = vmatprep.subr.mxu0 0.0
        %831 = vmatpush1.msra.mxu0 %v757
        %832 = vmatprep.subr.mxu0 0.0
        %833 = vmatpush1.msra.mxu0 %v758
        %834 = vmatprep.subr.mxu0 0.0
        %835 = vmatpush1.msra.mxu0 %v759
        %836 = vmatprep.subr.mxu0 0.0
        %837 = vmatpush1.msra.mxu0 %v760
        %838 = vmatprep.subr.mxu0 0.0
        %839 = vmatpush1.msra.mxu0 %v761
        %840 = vmatprep.subr.mxu0 0.0
        %841 = vmatpush1.msra.mxu0 %v762
        %842 = vmatprep.subr.mxu0 0.0
        %843 = vmatpush1.msra.mxu0 %v763
        %844 = vmatprep.subr.mxu0 0.0
        %845 = vmatpush1.msra.mxu0 %v764
        %846 = vmatprep.subr.mxu0 0.0
        %847 = vmatpush1.msra.mxu0 %v765
        %848 = vmatprep.subr.mxu0 0.0
        %849 = vmatpush1.msra.mxu0 %v766
        %850 = vmatprep.subr.mxu0 0.0
        %851 = vmatpush1.msra.mxu0 %v767
        %852 = vmatprep.subr.mxu0 0.0
        %853 = vmatpush1.msra.mxu0 %v768
        %854 = vmatprep.subr.mxu0 0.0
        %855 = vmatpush1.msra.mxu0 %v769
        %856 = vmatprep.subr.mxu0 0.0
        %857 = vmatpush1.msra.mxu0 %v770
        %858 = vmatprep.subr.mxu0 0.0
        %859 = vmatpush1.msra.mxu0 %v771
        %860 = vmatprep.subr.mxu0 0.0
        %861 = vmatpush1.msra.mxu0 %v772
        %862 = vmatprep.subr.mxu0 0.0
        %863 = vmatpush1.msra.mxu0 %v773
        %864 = vmatprep.subr.mxu0 0.0
        %865 = vmatpush1.msra.mxu0 %v774
        %866 = vmatprep.subr.mxu0 0.0
        %867 = vmatpush1.msra.mxu0 %v775
        %868 = vmatprep.subr.mxu0 0.0
        %869 = vmatpush1.msra.mxu0 %v776
        %870 = vmatprep.subr.mxu0 0.0
        %871 = vmatpush1.msra.mxu0 %v777
        %872 = vmatprep.subr.mxu0 0.0
        %873 = vmatpush1.msra.mxu0 %v778
        %874 = vmatprep.subr.mxu0 0.0
        %875 = vmatpush1.msra.mxu0 %v779
        %876 = vmatprep.mubr.f32.mxu0 %v487
        %877 = vmatmul.mubr.f32.gmra.mrb[0].mxu0 %v385
        %v878 = vpop.f32.mrb[0].mxu0
        %v879 = vadd.f32 0.0, %v878
        %v880 = vpop.f32.mrb[0].mxu0
        %881 = vmatprep.mubr.f32.mxu0 %v492
        %882 = vmatmul.mubr.f32.gmra.mrb[0].mxu0 %v390
        %v883 = vpop.f32.mrb[0].mxu0
        %v884 = vadd.f32 0.0, %v883
        %v885 = vpop.f32.mrb[0].mxu0
        %886 = vdwg.mxu0
        %887 = vmatprep.subr.mxu0 0.0
        %888 = vmatpush1.msra.mxu0 %v780
        %889 = vmatprep.subr.mxu0 0.0
        %890 = vmatpush1.msra.mxu0 %v781
        %891 = vmatprep.subr.mxu0 0.0
        %892 = vmatpush1.msra.mxu0 %v782
        %893 = vmatprep.subr.mxu0 0.0
        %894 = vmatpush1.msra.mxu0 %v783
        %895 = vmatprep.subr.mxu0 0.0
        %896 = vmatpush1.msra.mxu0 %v784
        %897 = vmatprep.subr.mxu0 0.0
        %898 = vmatpush1.msra.mxu0 %v785
        %899 = vmatprep.subr.mxu0 0.0
        %900 = vmatpush1.msra.mxu0 %v786
        %901 = vmatprep.subr.mxu0 0.0
        %902 = vmatpush1.msra.mxu0 %v787
        %903 = vmatprep.subr.mxu0 0.0
        %904 = vmatpush1.msra.mxu0 %v788
        %905 = vmatprep.subr.mxu0 0.0
        %906 = vmatpush1.msra.mxu0 %v789
        %907 = vmatprep.subr.mxu0 0.0
        %908 = vmatpush1.msra.mxu0 %v790
        %909 = vmatprep.subr.mxu0 0.0
        %910 = vmatpush1.msra.mxu0 %v791
        %911 = vmatprep.subr.mxu0 0.0
        %912 = vmatpush1.msra.mxu0 %v792
        %913 = vmatprep.subr.mxu0 0.0
        %914 = vmatpush1.msra.mxu0 %v793
        %915 = vmatprep.subr.mxu0 0.0
        %916 = vmatpush1.msra.mxu0 %v794
        %917 = vmatprep.subr.mxu0 0.0
        %918 = vmatpush1.msra.mxu0 %v795
        %919 = vmatprep.subr.mxu0 0.0
        %920 = vmatpush1.msra.mxu0 %v796
        %921 = vmatprep.subr.mxu0 0.0
        %922 = vmatpush1.msra.mxu0 %v797
        %923 = vmatprep.subr.mxu0 0.0
        %924 = vmatpush1.msra.mxu0 %v798
        %925 = vmatprep.subr.mxu0 0.0
        %926 = vmatpush1.msra.mxu0 %v799
        %927 = vmatprep.subr.mxu0 0.0
        %928 = vmatpush1.msra.mxu0 %v800
        %929 = vmatprep.subr.mxu0 0.0
        %930 = vmatpush1.msra.mxu0 %v801
        %931 = vmatprep.subr.mxu0 0.0
        %932 = vmatpush1.msra.mxu0 %v802
        %933 = vmatprep.subr.mxu0 0.0
        %934 = vmatpush1.msra.mxu0 %v803
        %935 = vmatprep.subr.mxu0 0.0
        %936 = vmatpush1.msra.mxu0 %v804
        %937 = vmatprep.subr.mxu0 0.0
        %938 = vmatpush1.msra.mxu0 %v805
        %939 = vmatprep.subr.mxu0 0.0
        %940 = vmatpush1.msra.mxu0 %v806
        %941 = vmatprep.subr.mxu0 0.0
        %942 = vmatpush1.msra.mxu0 %v807
        %943 = vmatprep.subr.mxu0 0.0
        %944 = vmatpush1.msra.mxu0 %v808
        %945 = vmatprep.subr.mxu0 0.0
        %946 = vmatpush1.msra.mxu0 %v809
        %947 = vmatprep.subr.mxu0 0.0
        %948 = vmatpush1.msra.mxu0 %v810
        %949 = vmatprep.subr.mxu0 0.0
        %950 = vmatpush1.msra.mxu0 %v811
        %951 = vmatprep.mubr.f32.mxu0 %v731
        %952 = vmatmul.mubr.f32.gmra.mrb[0].mxu0 %v605
        %v953 = vpop.f32.mrb[0].mxu0
        %v954 = vadd.f32 %v879, %v953
        %v955 = vpop.f32.mrb[0].mxu0
        %956 = vmatprep.mubr.f32.mxu0 %v736
        %957 = vmatmul.mubr.f32.gmra.mrb[0].mxu0 %v610
        %v958 = vpop.f32.mrb[0].mxu0
        %v959 = vadd.f32 %v884, %v958
        %v960 = vpop.f32.mrb[0].mxu0
        %961 = vdwg.mxu0
        %v962 = vadd.f32 %v746, %v954
        %v963 = vadd.f32 %v747, %v959
        %vm964 = vcmp.ge.f32.partialorder %v962, 0.0
        %vm965 = vcmp.ge.f32.partialorder %v963, 0.0
        %v966 = vmul.f32 %v962, 0.01
        %v967 = vmul.f32 %v963, 0.01
        %v968 = vsel %vm964, %v962, %v966
        %v969 = vsel %vm965, %v963, %v967
        %970 = vst [vmem:[%s244] sm:$0xff] %v968
        %971 = vst [vmem:[%s244 + $0x8] sm:$0xff] %v969
        %s972 = sand.u32 %s119, 1
        %s973 = scalar_lea.sflag [#allocation4], %s972
        %s974 = sand.u32 %s119, 1
        %s975 = smul.addr %s974, 16
        %s976 = scalar_lea.vmem [#allocation8], %s975
        // Predicated region
        $region49: #{tpu_custom_call.1} parent=35 // pred_check
          %p977 = pneg %p129
        $region50: #{tpu_custom_call.1} parent=35 // pred_check_branch
          %979 = sbr.rel (%p977) target = $region52
        $region51: #{tpu_custom_call.1} parent=35 // pred_region
          %s981 = ssub.s32 256, 256
          %982 = vsyncadd %s973, %s981
          %s983 = smul.addr %s22, 2
          %s984 = smul.addr %s983, 128
          %s985 = scalar_lea.hbm %s4, %s984
          %s986 = sshll.u32 %s976, 4
          %s987 = int_to_ptr.vmem [resolvable:$true] %s986
          %992 = dma.vmem_to_hbm [thread:$0]  %s987, 256, %s985, %s973, 128, 128, 8
        $region52: #{tpu_custom_call.1} parent=35 // pred_fallthru
          _
      $region36: #{tpu_custom_call.1} parent=5 // pred_fallthru
        _
      %p993 = scmp.le.s32.totalorder 2, %s17
      // Predicated region
      $region53: #{tpu_custom_call.1} parent=5 // pred_check
        %p994 = pneg %p993
      $region54: #{tpu_custom_call.1} parent=5 // pred_check_branch
        %996 = sbr.rel (%p994) target = $region56
      $region55: #{tpu_custom_call.1} parent=5 // pred_region
        %s997 = ssub.s32 %s17, 2
        // Predicated region
        $region57: #{tpu_custom_call.1} parent=55 // pred_check
          %p998 = pneg %p135
        $region58: #{tpu_custom_call.1} parent=55 // pred_check_branch
          %1000 = sbr.rel (%p998) target = $region60
        $region59: #{tpu_custom_call.1} parent=55 // pred_region
          %s1001 = sand.u32 %s120, 1
          %s1002 = scalar_lea.sflag [#allocation4], %s1001
          %s1003 = sand.u32 %s120, 1
          %s1004 = smul.addr %s1003, 16
          %s1005 = scalar_lea.vmem [#allocation8], %s1004
          %1006 = dma.done %s1002, 256
        $region60: #{tpu_custom_call.1} parent=55 // pred_fallthru
          _
      $region56: #{tpu_custom_call.1} parent=5 // pred_fallthru
        _
    $region6: #{tpu_custom_call.1} parent=1 // loop_footer
      %s21 = sadd.s32 1, %s17
    $region7: #{tpu_custom_call.1} parent=1 // loop_footer_branch
      %16 = sbr.rel target = $region3
    $region8: #{tpu_custom_call.1} parent=1 // loop_exit
      _
    %1007 = vsyncpa [#allocation3], 1
    %s1008 = scalar_lea.sflag [#allocation3], 1
    %1009 = vsyncpa %s1008, 1
    %1010 = vsyncpa [#allocation6], 1
    %1011 = vsyncpa [#allocation4], 1
    %s1012 = scalar_lea.sflag [#allocation4], 1
    %1013 = vsyncpa %s1012, 1

</llo_original>
